<compile_context>
chip_gen: v7x
topology: tpu7x:2x2x1
jax: 0.10.0
libtpu: 0.0.40
codegen_flags: <defaults>
</compile_context>

<pallas_src>
import jax
import jax.numpy as jnp
from jax.experimental import pallas as pl
from jax.experimental.pallas import tpu as pltpu

IN_DIM = 28 * 28   # 784
N1 = 128
N2 = 128
OUT_DIM = 10
OUT_PAD = 128      # lane-dense padded output width


def dense3_kernel(x_ref, w1_ref, b1_ref, w2_ref, b2_ref, w3_ref, b3_ref, o_ref):
    # x_ref : (TB, 784) f32       w1_ref: (784, 128) bf16   b1_ref: (1, 128) f32
    # w2_ref: (128, 128) bf16     b2_ref: (1, 128) f32
    # w3_ref: (128, 128) bf16 (zero-padded cols 10..127)     b3_ref: (1, 128) f32
    # o_ref : (TB, 128) bf16 (lane-dense; caller slices [:, :10] and casts f32)
    x = x_ref[...].astype(jnp.bfloat16)             # cast in-kernel (VPU, hidden under DMA)

    h1 = jnp.dot(x, w1_ref[...], preferred_element_type=jnp.float32) + b1_ref[...]
    h1 = jnp.maximum(h1, 0.0)                       # relu(fc1); dropout(eval)=id

    h2 = jnp.dot(h1.astype(jnp.bfloat16), w2_ref[...],
                 preferred_element_type=jnp.float32) + b2_ref[...]
    h2 = jnp.maximum(h2, 0.0)                       # relu(fc2); dropout(eval)=id

    out = jnp.dot(h2.astype(jnp.bfloat16), w3_ref[...],
                  preferred_element_type=jnp.float32) + b3_ref[...]
    o_ref[...] = out.astype(o_ref.dtype)            # bf16, unmasked 128-lane store


def _choose_tile_b(B):
    """Batch tile: multiples of 256 for big batches (fills the 256-row MXU pass
    on v6e/v7x and gives an even 2-step grid for v7x's two TCs); up to 1024 for
    very large batches; small batches get a single 8-aligned step."""
    if B >= 2048:
        return 1024
    if B >= 512:
        half = (B + 1) // 2
        return ((half + 255) // 256) * 256          # even 2-step grid
    return max(8, ((B + 7) // 8) * 8)               # single step


def dense3_forward(x, params, *, tile_b=None):
    """x: (B, 1, 28, 28) float32 (NCHW).  Returns logits (B, 10) float32."""
    w1, b1, w2, b2, w3, b3 = params
    B = x.shape[0]
    x2d = x.reshape(B, IN_DIM)                      # contiguous reshape, no cast, no copy

    if tile_b is None:
        tile_b = _choose_tile_b(B)
    B_pad = ((B + tile_b - 1) // tile_b) * tile_b
    if B_pad != B:
        x2d = jnp.pad(x2d, ((0, B_pad - B), (0, 0)))
    grid = (B_pad // tile_b,)

    # Weights stored as (in, out) = torch weight.T ; biases as (1, out) f32.
    w1_bf = w1.astype(jnp.bfloat16)
    w2_bf = w2.astype(jnp.bfloat16)
    # Lane-dense final layer: pad 10 -> 128 output columns with zeros, bf16.
    w3_p = jnp.zeros((N2, OUT_PAD), jnp.float32).at[:, :OUT_DIM].set(w3).astype(jnp.bfloat16)
    b3_p = jnp.zeros((1, OUT_PAD), jnp.float32).at[:, :OUT_DIM].set(b3)

    out_padded = pl.pallas_call(
        dense3_kernel,
        out_shape=jax.ShapeDtypeStruct((B_pad, OUT_PAD), jnp.bfloat16),
        grid_spec=pltpu.PrefetchScalarGridSpec(
            num_scalar_prefetch=0,
            grid=grid,
            in_specs=[
                pl.BlockSpec((tile_b, IN_DIM), lambda i: (i, 0)),    # x tile (f32)
                pl.BlockSpec((IN_DIM, N1), lambda i: (0, 0)),        # W1 (bf16)
                pl.BlockSpec((1, N1), lambda i: (0, 0)),             # b1 (f32)
                pl.BlockSpec((N1, N2), lambda i: (0, 0)),            # W2 (bf16)
                pl.BlockSpec((1, N2), lambda i: (0, 0)),             # b2 (f32)
                pl.BlockSpec((N2, OUT_PAD), lambda i: (0, 0)),       # W3 (bf16, padded)
                pl.BlockSpec((1, OUT_PAD), lambda i: (0, 0)),        # b3 (f32, padded)
            ],
            out_specs=pl.BlockSpec((tile_b, OUT_PAD), lambda i: (i, 0)),
        ),
        compiler_params=pltpu.CompilerParams(
            dimension_semantics=("parallel",),
            vmem_limit_bytes=32 * 1024 * 1024,      # headroom for tile_b=1024 on v5e
        ),
    )(x2d, w1_bf, b1, w2_bf, b2, w3_p, b3_p)

    return out_padded[:B, :OUT_DIM].astype(jnp.float32)


def init_params(key):
    """Deterministic init matching torch.nn.Linear shapes (fan-in uniform)."""
    k1, k2, k3, k4, k5, k6 = jax.random.split(key, 6)

    def lin(kw, kb, fan_in, fan_out):
        bound = 1.0 / jnp.sqrt(fan_in)
        # torch stores weight as (out, in); we keep the (in, out) transpose
        # so the kernel computes x @ W directly (same math as x @ weight.T).
        w = jax.random.uniform(kw, (fan_in, fan_out), jnp.float32, -bound, bound)
        b = jax.random.uniform(kb, (1, fan_out), jnp.float32, -bound, bound)
        return w, b

    w1, b1 = lin(k1, k2, IN_DIM, N1)
    w2, b2 = lin(k3, k4, N1, N2)
    w3, b3 = lin(k5, k6, N2, OUT_DIM)
    return (w1, b1, w2, b2, w3, b3)


def dense3_reference_f32(x, params):
    """Pure-JAX f32 reference (exact module math)."""
    w1, b1, w2, b2, w3, b3 = params
    h = x.reshape(x.shape[0], IN_DIM)
    h = jnp.maximum(h @ w1 + b1, 0.0)
    h = jnp.maximum(h @ w2 + b2, 0.0)
    return h @ w3 + b3


def dense3_reference_bf16(x, params):
    """Pure-JAX reference mirroring the kernel's bf16 casts (all three dots + output)."""
    w1, b1, w2, b2, w3, b3 = params
    h = x.reshape(x.shape[0], IN_DIM).astype(jnp.bfloat16)
    h = jnp.dot(h, w1.astype(jnp.bfloat16), preferred_element_type=jnp.float32) + b1
    h = jnp.maximum(h, 0.0)
    h = jnp.dot(h.astype(jnp.bfloat16), w2.astype(jnp.bfloat16),
                preferred_element_type=jnp.float32) + b2
    h = jnp.maximum(h, 0.0)
    out = jnp.dot(h.astype(jnp.bfloat16), w3.astype(jnp.bfloat16),
                  preferred_element_type=jnp.float32) + b3
    return out.astype(jnp.bfloat16).astype(jnp.float32)


if __name__ == "__main__":
    key = jax.random.PRNGKey(0)
    kx, kp, kx2 = jax.random.split(key, 3)
    params = init_params(kp)

    # Small case (single grid step).
    B = 8
    x = jax.random.normal(kx, (B, 1, 28, 28), jnp.float32)   # NCHW, like MNIST
    out = jax.block_until_ready(dense3_forward(x, params))
    assert out.shape == (B, OUT_DIM)
    assert jnp.allclose(out, dense3_reference_bf16(x, params), atol=2e-2, rtol=2e-2), \
        "mismatch vs bf16-mirrored reference"
    assert jnp.allclose(out, dense3_reference_f32(x, params), atol=1e-1, rtol=1e-1), \
        "mismatch vs f32 reference"

    # Non-multiple batch: exercises batch padding within a grid step.
    B2 = 50
    x2 = jax.random.normal(kx2, (B2, 1, 28, 28), jnp.float32)
    out2 = jax.block_until_ready(dense3_forward(x2, params))
    assert out2.shape == (B2, OUT_DIM)
    assert jnp.allclose(out2, dense3_reference_bf16(x2, params), atol=2e-2, rtol=2e-2), \
        "mismatch vs bf16-mirrored reference (padded batch)"

    # Explicit multi-step grid (2 steps -> both v7x TensorCores) at a modest size.
    B3 = 512
    x3 = jax.random.normal(kx, (B3, 1, 28, 28), jnp.float32)
    out3 = jax.block_until_ready(dense3_forward(x3, params))
    assert out3.shape == (B3, OUT_DIM)
    assert jnp.allclose(out3, dense3_reference_bf16(x3, params), atol=2e-2, rtol=2e-2), \
        "mismatch vs bf16-mirrored reference (multi-step grid)"

    # predict() equivalent (argmax of softmax == argmax of logits) — plain JAX glue.
    _ = jnp.argmax(jax.nn.softmax(out, axis=1), axis=1)

    print("KERNEL_OK")
</pallas_src>

<mosaic_0001>
module attributes {stable_mosaic.version = 11 : i64} {
  func.func @dense3_kernel(%arg0: i32, %arg1: memref<8x784xf32, #tpu.memory_space<vmem>>, %arg2: memref<784x128xbf16, #tpu.memory_space<vmem>>, %arg3: memref<1x128xf32, #tpu.memory_space<vmem>>, %arg4: memref<128x128xbf16, #tpu.memory_space<vmem>>, %arg5: memref<1x128xf32, #tpu.memory_space<vmem>>, %arg6: memref<128x128xbf16, #tpu.memory_space<vmem>>, %arg7: memref<1x128xf32, #tpu.memory_space<vmem>>, %arg8: memref<8x128xbf16, #tpu.memory_space<vmem>>) attributes {dimension_semantics = [#tpu.dimension_semantics<parallel>], iteration_bounds = array<i64: 1>, scalar_prefetch = 0 : i64, scratch_operands = 0 : i64, tpu.core_type = #tpu.core_type<tc>, window_params = [{transform_indices = @transform_0, window_bounds = array<i64: 8, 784>}, {pipeline_mode = #tpu.pipeline_mode<synchronous>, transform_indices = @transform_1, window_bounds = array<i64: 784, 128>}, {pipeline_mode = #tpu.pipeline_mode<synchronous>, transform_indices = @transform_2, window_bounds = array<i64: 1, 128>}, {pipeline_mode = #tpu.pipeline_mode<synchronous>, transform_indices = @transform_3, window_bounds = array<i64: 128, 128>}, {pipeline_mode = #tpu.pipeline_mode<synchronous>, transform_indices = @transform_4, window_bounds = array<i64: 1, 128>}, {pipeline_mode = #tpu.pipeline_mode<synchronous>, transform_indices = @transform_5, window_bounds = array<i64: 128, 128>}, {pipeline_mode = #tpu.pipeline_mode<synchronous>, transform_indices = @transform_6, window_bounds = array<i64: 1, 128>}, {transform_indices = @transform_7, window_bounds = array<i64: 8, 128>}]} {
    %c0 = arith.constant 0 : index
    %c0_0 = arith.constant 0 : index
    %0 = vector.load %arg1[%c0, %c0_0] : memref<8x784xf32, #tpu.memory_space<vmem>>, vector<8x784xf32>
    %1 = arith.truncf %0 : vector<8x784xf32> to vector<8x784xbf16>
    %c0_1 = arith.constant 0 : index
    %c0_2 = arith.constant 0 : index
    %2 = vector.load %arg2[%c0_1, %c0_2] : memref<784x128xbf16, #tpu.memory_space<vmem>>, vector<784x128xbf16>
    %cst = arith.constant dense<0.000000e+00> : vector<8x128xf32>
    %3 = tpu.matmul %1, %2, %cst {dimension_numbers = #tpu.dot_dimension_numbers<[1], [0], [0], [1], [0, 0, 1, 1], [], []>} : vector<8x784xbf16>, vector<784x128xbf16>, vector<8x128xf32> -> vector<8x128xf32>
    %c0_3 = arith.constant 0 : index
    %c0_4 = arith.constant 0 : index
    %4 = vector.load %arg3[%c0_3, %c0_4] : memref<1x128xf32, #tpu.memory_space<vmem>>, vector<1x128xf32>
    %5 = vector.broadcast %4 : vector<1x128xf32> to vector<8x128xf32>
    %6 = arith.addf %3, %5 : vector<8x128xf32>
    %cst_5 = arith.constant 0.000000e+00 : f32
    %7 = vector.broadcast %cst_5 : f32 to vector<8x128xf32>
    %8 = arith.maximumf %6, %7 : vector<8x128xf32>
    %9 = arith.truncf %8 : vector<8x128xf32> to vector<8x128xbf16>
    %c0_6 = arith.constant 0 : index
    %c0_7 = arith.constant 0 : index
    %10 = vector.load %arg4[%c0_6, %c0_7] : memref<128x128xbf16, #tpu.memory_space<vmem>>, vector<128x128xbf16>
    %cst_8 = arith.constant dense<0.000000e+00> : vector<8x128xf32>
    %11 = tpu.matmul %9, %10, %cst_8 {dimension_numbers = #tpu.dot_dimension_numbers<[1], [0], [0], [1], [0, 0, 1, 1], [], []>} : vector<8x128xbf16>, vector<128x128xbf16>, vector<8x128xf32> -> vector<8x128xf32>
    %c0_9 = arith.constant 0 : index
    %c0_10 = arith.constant 0 : index
    %12 = vector.load %arg5[%c0_9, %c0_10] : memref<1x128xf32, #tpu.memory_space<vmem>>, vector<1x128xf32>
    %13 = vector.broadcast %12 : vector<1x128xf32> to vector<8x128xf32>
    %14 = arith.addf %11, %13 : vector<8x128xf32>
    %cst_11 = arith.constant 0.000000e+00 : f32
    %15 = vector.broadcast %cst_11 : f32 to vector<8x128xf32>
    %16 = arith.maximumf %14, %15 : vector<8x128xf32>
    %17 = arith.truncf %16 : vector<8x128xf32> to vector<8x128xbf16>
    %c0_12 = arith.constant 0 : index
    %c0_13 = arith.constant 0 : index
    %18 = vector.load %arg6[%c0_12, %c0_13] : memref<128x128xbf16, #tpu.memory_space<vmem>>, vector<128x128xbf16>
    %cst_14 = arith.constant dense<0.000000e+00> : vector<8x128xf32>
    %19 = tpu.matmul %17, %18, %cst_14 {dimension_numbers = #tpu.dot_dimension_numbers<[1], [0], [0], [1], [0, 0, 1, 1], [], []>} : vector<8x128xbf16>, vector<128x128xbf16>, vector<8x128xf32> -> vector<8x128xf32>
    %c0_15 = arith.constant 0 : index
    %c0_16 = arith.constant 0 : index
    %20 = vector.load %arg7[%c0_15, %c0_16] : memref<1x128xf32, #tpu.memory_space<vmem>>, vector<1x128xf32>
    %21 = vector.broadcast %20 : vector<1x128xf32> to vector<8x128xf32>
    %22 = arith.addf %19, %21 : vector<8x128xf32>
    %23 = arith.truncf %22 : vector<8x128xf32> to vector<8x128xbf16>
    %c0_17 = arith.constant 0 : index
    %c0_18 = arith.constant 0 : index
    %24 = vector.load %arg8[%c0_17, %c0_18] : memref<8x128xbf16, #tpu.memory_space<vmem>>, vector<8x128xbf16>
    tpu.vector_store %arg8[%c0_17, %c0_18], %23 {strides = array<i32>} : memref<8x128xbf16, #tpu.memory_space<vmem>>, vector<8x128xbf16>,
    return
  }
  func.func @transform_0(%arg0: i32) -> (i32, i32) {
    %c0_i32 = arith.constant 0 : i32
    %c0_i32_0 = arith.constant 0 : i32
    return %arg0, %c0_i32 : i32, i32
  }
  func.func @transform_1(%arg0: i32) -> (i32, i32) {
    %c0_i32 = arith.constant 0 : i32
    %c0_i32_0 = arith.constant 0 : i32
    %c0_i32_1 = arith.constant 0 : i32
    return %c0_i32, %c0_i32_0 : i32, i32
  }
  func.func @transform_2(%arg0: i32) -> (i32, i32) {
    %c0_i32 = arith.constant 0 : i32
    %c0_i32_0 = arith.constant 0 : i32
    %c0_i32_1 = arith.constant 0 : i32
    return %c0_i32, %c0_i32_0 : i32, i32
  }
  func.func @transform_3(%arg0: i32) -> (i32, i32) {
    %c0_i32 = arith.constant 0 : i32
    %c0_i32_0 = arith.constant 0 : i32
    %c0_i32_1 = arith.constant 0 : i32
    return %c0_i32, %c0_i32_0 : i32, i32
  }
  func.func @transform_4(%arg0: i32) -> (i32, i32) {
    %c0_i32 = arith.constant 0 : i32
    %c0_i32_0 = arith.constant 0 : i32
    %c0_i32_1 = arith.constant 0 : i32
    return %c0_i32, %c0_i32_0 : i32, i32
  }
  func.func @transform_5(%arg0: i32) -> (i32, i32) {
    %c0_i32 = arith.constant 0 : i32
    %c0_i32_0 = arith.constant 0 : i32
    %c0_i32_1 = arith.constant 0 : i32
    return %c0_i32, %c0_i32_0 : i32, i32
  }
  func.func @transform_6(%arg0: i32) -> (i32, i32) {
    %c0_i32 = arith.constant 0 : i32
    %c0_i32_0 = arith.constant 0 : i32
    %c0_i32_1 = arith.constant 0 : i32
    return %c0_i32, %c0_i32_0 : i32, i32
  }
  func.func @transform_7(%arg0: i32) -> (i32, i32) {
    %c0_i32 = arith.constant 0 : i32
    %c0_i32_0 = arith.constant 0 : i32
    return %arg0, %c0_i32 : i32, i32
  }
}

</mosaic_0001>

<llo_original>
// kernel: tpu_custom_call.1
$region0: #{tpu_custom_call.1}
  #allocation0 [shape = 'u32[]', space=smem, size = 0x4, offset = 0x4, fixed_abs, tag = 'smem constant byte address 0x4 - core index']
  #allocation1 [shape = 'u32[144,128]{1,0:T(1,128)}', space=vmem, size = 0x12000, scoped, tag = 'internal scratch']
  %s0 = inlined_call_operand.hbm [shape: f32[8,784], index: 0, kind: input, shape index: {}]
  %s1 = inlined_call_operand.hbm [shape: bf16[784,128], index: 1, kind: input, shape index: {}]
  %s2 = inlined_call_operand.vmem [shape: f32[1,128], index: 2, kind: input, shape index: {}]
  %s3 = inlined_call_operand.hbm [shape: bf16[128,128], index: 3, kind: input, shape index: {}]
  %s4 = inlined_call_operand.vmem [shape: f32[1,128], index: 4, kind: input, shape index: {}]
  %s5 = inlined_call_operand.hbm [shape: bf16[128,128], index: 5, kind: input, shape index: {}]
  %s6 = inlined_call_operand.vmem [shape: f32[1,128], index: 6, kind: input, shape index: {}]
  %s7 = inlined_call_operand.hbm [shape: bf16[8,128], index: 7, kind: output, shape index: {}]
  %s8 = sld [smem:[#allocation0]]
  $region54: #{tpu_custom_call.1} parent=0
    _
  %s10 = ssub.s32 1, %s8
  %s11 = scalar_select 0, %s10, %s8
  $region1: #{tpu_custom_call.1} parent=0
    #allocation2 [shape = 'u8[28672]{0}', space=vmem, size = 0x7000, scoped, tag = 'input window, operand 0, single buffered']
    #allocation3 [shape = 's32[1]{0}', space=sflag, size = 0x4, scoped, tag = 'scoped memory for tpu_custom_call.1']
    #allocation4 [shape = 's32[1]{0}', space=sflag, size = 0x4, scoped, tag = 'scoped memory for tpu_custom_call.1']
    #allocation5 [shape = 'u8[200704]{0}', space=vmem, size = 0x31000, scoped, tag = 'input window, operand 1, single buffered']
    #allocation6 [shape = 's32[1]{0}', space=sflag, size = 0x4, scoped, tag = 'scoped memory for tpu_custom_call.1']
    #allocation7 [shape = 'u8[32768]{0}', space=vmem, size = 0x8000, scoped, tag = 'input window, operand 3, single buffered']
    #allocation8 [shape = 'u8[32768]{0}', space=vmem, size = 0x8000, scoped, tag = 'input window, operand 5, single buffered']
    #allocation9 [shape = 's32[1]{0}', space=sflag, size = 0x4, scoped, tag = 'scoped memory for tpu_custom_call.1']
    #allocation10 [shape = 'u8[2048]{0}', space=vmem, size = 0x800, scoped, tag = 'output window, operand 0, single buffered']
    %12 = vsyncpa [#allocation3], 0
    %13 = vsyncpa [#allocation6], 0
    %14 = vsyncpa [#allocation9], 0
    %15 = vsyncpa [#allocation4], 0
    // Predicated region
    $region2: #{tpu_custom_call.1} parent=1 // pred_check
      _
    $region3: #{tpu_custom_call.1} parent=1 // pred_check_branch
      %17 = sbr.rel (0) target = $region5
    $region4: #{tpu_custom_call.1} parent=1 // pred_region
      %s19 = ssub.s32 896, 896
      %20 = vsyncadd [#allocation3], %s19
      %s22 = sshll.u32 [#allocation2], 4
      %s23 = int_to_ptr.vmem [resolvable:$true] %s22
      %25 = dma.hbm_to_vmem [thread:$0]  %s0, 896, %s23, [#allocation3]
    $region5: #{tpu_custom_call.1} parent=1 // pred_fallthru
      _
    // Predicated region
    $region6: #{tpu_custom_call.1} parent=1 // pred_check
      _
    $region7: #{tpu_custom_call.1} parent=1 // pred_check_branch
      %27 = sbr.rel (0) target = $region9
    $region8: #{tpu_custom_call.1} parent=1 // pred_region
      %s29 = ssub.s32 6272, 6272
      %30 = vsyncadd [#allocation6], %s29
      %s31 = sshll.u32 [#allocation5], 4
      %s32 = int_to_ptr.vmem [resolvable:$true] %s31
      %37 = dma.hbm_to_vmem [thread:$0]  %s1, 6272, %s32, [#allocation6], 64, 64, 4
    $region9: #{tpu_custom_call.1} parent=1 // pred_fallthru
      _
    // Predicated region
    $region10: #{tpu_custom_call.1} parent=1 // pred_check
      _
    $region11: #{tpu_custom_call.1} parent=1 // pred_check_branch
      %39 = sbr.rel (0) target = $region13
    $region12: #{tpu_custom_call.1} parent=1 // pred_region
      _
    $region13: #{tpu_custom_call.1} parent=1 // pred_fallthru
      _
    // Predicated region
    $region14: #{tpu_custom_call.1} parent=1 // pred_check
      _
    $region15: #{tpu_custom_call.1} parent=1 // pred_check_branch
      %41 = sbr.rel (0) target = $region17
    $region16: #{tpu_custom_call.1} parent=1 // pred_region
      %s43 = ssub.s32 1024, 1024
      %44 = vsyncadd [#allocation6], %s43
      %s45 = sshll.u32 [#allocation7], 4
      %s46 = int_to_ptr.vmem [resolvable:$true] %s45
      %51 = dma.hbm_to_vmem [thread:$0]  %s3, 1024, %s46, [#allocation6], 64, 64, 4
    $region17: #{tpu_custom_call.1} parent=1 // pred_fallthru
      _
    // Predicated region
    $region18: #{tpu_custom_call.1} parent=1 // pred_check
      _
    $region19: #{tpu_custom_call.1} parent=1 // pred_check_branch
      %53 = sbr.rel (0) target = $region21
    $region20: #{tpu_custom_call.1} parent=1 // pred_region
      _
    $region21: #{tpu_custom_call.1} parent=1 // pred_fallthru
      _
    // Predicated region
    $region22: #{tpu_custom_call.1} parent=1 // pred_check
      _
    $region23: #{tpu_custom_call.1} parent=1 // pred_check_branch
      %55 = sbr.rel (0) target = $region25
    $region24: #{tpu_custom_call.1} parent=1 // pred_region
      %s57 = ssub.s32 1024, 1024
      %58 = vsyncadd [#allocation9], %s57
      %s59 = sshll.u32 [#allocation8], 4
      %s60 = int_to_ptr.vmem [resolvable:$true] %s59
      %65 = dma.hbm_to_vmem [thread:$0]  %s5, 1024, %s60, [#allocation9], 64, 64, 4
    $region25: #{tpu_custom_call.1} parent=1 // pred_fallthru
      _
    // Predicated region
    $region26: #{tpu_custom_call.1} parent=1 // pred_check
      _
    $region27: #{tpu_custom_call.1} parent=1 // pred_check_branch
      %67 = sbr.rel (0) target = $region29
    $region28: #{tpu_custom_call.1} parent=1 // pred_region
      _
    $region29: #{tpu_custom_call.1} parent=1 // pred_fallthru
      _
    // Predicated region
    $region30: #{tpu_custom_call.1} parent=1 // pred_check
      _
    $region31: #{tpu_custom_call.1} parent=1 // pred_check_branch
      %69 = sbr.rel (0) target = $region33
    $region32: #{tpu_custom_call.1} parent=1 // pred_region
      %70 = dma.done [#allocation3], 896
    $region33: #{tpu_custom_call.1} parent=1 // pred_fallthru
      _
    // Predicated region
    $region34: #{tpu_custom_call.1} parent=1 // pred_check
      _
    $region35: #{tpu_custom_call.1} parent=1 // pred_check_branch
      %72 = sbr.rel (0) target = $region37
    $region36: #{tpu_custom_call.1} parent=1 // pred_region
      %73 = dma.done [#allocation6], 6272
    $region37: #{tpu_custom_call.1} parent=1 // pred_fallthru
      _
    // Predicated region
    $region38: #{tpu_custom_call.1} parent=1 // pred_check
      _
    $region39: #{tpu_custom_call.1} parent=1 // pred_check_branch
      %75 = sbr.rel (0) target = $region41
    $region40: #{tpu_custom_call.1} parent=1 // pred_region
      %76 = dma.done [#allocation6], 1024
    $region41: #{tpu_custom_call.1} parent=1 // pred_fallthru
      _
    // Predicated region
    $region42: #{tpu_custom_call.1} parent=1 // pred_check
      _
    $region43: #{tpu_custom_call.1} parent=1 // pred_check_branch
      %78 = sbr.rel (0) target = $region45
    $region44: #{tpu_custom_call.1} parent=1 // pred_region
      %79 = dma.done [#allocation9], 1024
    $region45: #{tpu_custom_call.1} parent=1 // pred_fallthru
      _
    %v81 = vld [vmem:[#allocation2] sm:$0xff]
    %v82 = vld [vmem:[#allocation2 + $0x8] sm:$0xff]
    %v83 = vld [vmem:[#allocation2 + $0x10] sm:$0xff]
    %v84 = vld [vmem:[#allocation2 + $0x18] sm:$0xff]
    %v85 = vld [vmem:[#allocation2 + $0x20] sm:$0xff]
    %v86 = vld [vmem:[#allocation2 + $0x28] sm:$0xff]
    %v87 = vld [vmem:[#allocation2 + $0x30] sm:$0xff]
    %v88 = vpack.c.bf16 %v81, %v81
    %v89 = vpack.c.bf16 %v82, %v82
    %v90 = vpack.c.bf16 %v83, %v83
    %v91 = vpack.c.bf16 %v84, %v84
    %v92 = vpack.c.bf16 %v85, %v85
    %v93 = vpack.c.bf16 %v86, %v86
    %v94 = vpack.c.bf16 %v87, %v87
    %v95 = vld [vmem:[#allocation5] sm:$0xf]
    %v96 = vld [vmem:[#allocation5 + $0x4] sm:$0xf]
    %v97 = vld [vmem:[#allocation5 + $0x8] sm:$0xf]
    %v98 = vld [vmem:[#allocation5 + $0xc] sm:$0xf]
    %v99 = vld [vmem:[#allocation5 + $0x10] sm:$0xf]
    %v100 = vld [vmem:[#allocation5 + $0x14] sm:$0xf]
    %v101 = vld [vmem:[#allocation5 + $0x18] sm:$0xf]
    %v102 = vld [vmem:[#allocation5 + $0x1c] sm:$0xf]
    %v103 = vld [vmem:[#allocation5 + $0x20] sm:$0xf]
    %v104 = vld [vmem:[#allocation5 + $0x24] sm:$0xf]
    %v105 = vld [vmem:[#allocation5 + $0x28] sm:$0xf]
    %v106 = vld [vmem:[#allocation5 + $0x2c] sm:$0xf]
    %v107 = vld [vmem:[#allocation5 + $0x30] sm:$0xf]
    %v108 = vld [vmem:[#allocation5 + $0x34] sm:$0xf]
    %v109 = vld [vmem:[#allocation5 + $0x38] sm:$0xf]
    %v110 = vld [vmem:[#allocation5 + $0x3c] sm:$0xf]
    %v111 = vld [vmem:[#allocation5 + $0x40] sm:$0xf]
    %v112 = vld [vmem:[#allocation5 + $0x44] sm:$0xf]
    %v113 = vld [vmem:[#allocation5 + $0x48] sm:$0xf]
    %v114 = vld [vmem:[#allocation5 + $0x4c] sm:$0xf]
    %v115 = vld [vmem:[#allocation5 + $0x50] sm:$0xf]
    %v116 = vld [vmem:[#allocation5 + $0x54] sm:$0xf]
    %v117 = vld [vmem:[#allocation5 + $0x58] sm:$0xf]
    %v118 = vld [vmem:[#allocation5 + $0x5c] sm:$0xf]
    %v119 = vld [vmem:[#allocation5 + $0x60] sm:$0xf]
    %v120 = vld [vmem:[#allocation5 + $0x64] sm:$0xf]
    %v121 = vld [vmem:[#allocation5 + $0x68] sm:$0xf]
    %v122 = vld [vmem:[#allocation5 + $0x6c] sm:$0xf]
    %v123 = vld [vmem:[#allocation5 + $0x70] sm:$0xf]
    %v124 = vld [vmem:[#allocation5 + $0x74] sm:$0xf]
    %v125 = vld [vmem:[#allocation5 + $0x78] sm:$0xf]
    %v126 = vld [vmem:[#allocation5 + $0x7c] sm:$0xf]
    %v127 = vld [vmem:[#allocation5 + $0x80] sm:$0xf]
    %v128 = vld [vmem:[#allocation5 + $0x84] sm:$0xf]
    %v129 = vld [vmem:[#allocation5 + $0x88] sm:$0xf]
    %v130 = vld [vmem:[#allocation5 + $0x8c] sm:$0xf]
    %v131 = vld [vmem:[#allocation5 + $0x90] sm:$0xf]
    %v132 = vld [vmem:[#allocation5 + $0x94] sm:$0xf]
    %v133 = vld [vmem:[#allocation5 + $0x98] sm:$0xf]
    %v134 = vld [vmem:[#allocation5 + $0x9c] sm:$0xf]
    %v135 = vld [vmem:[#allocation5 + $0xa0] sm:$0xf]
    %v136 = vld [vmem:[#allocation5 + $0xa4] sm:$0xf]
    %v137 = vld [vmem:[#allocation5 + $0xa8] sm:$0xf]
    %v138 = vld [vmem:[#allocation5 + $0xac] sm:$0xf]
    %v139 = vld [vmem:[#allocation5 + $0xb0] sm:$0xf]
    %v140 = vld [vmem:[#allocation5 + $0xb4] sm:$0xf]
    %v141 = vld [vmem:[#allocation5 + $0xb8] sm:$0xf]
    %v142 = vld [vmem:[#allocation5 + $0xbc] sm:$0xf]
    %v143 = vld [vmem:[#allocation5 + $0xc0] sm:$0xf]
    %v144 = vld [vmem:[#allocation5 + $0xc4] sm:$0xf]
    %v145 = vld [vmem:[#allocation5 + $0xc8] sm:$0xf]
    %v146 = vld [vmem:[#allocation5 + $0xcc] sm:$0xf]
    %v147 = vld [vmem:[#allocation5 + $0xd0] sm:$0xf]
    %v148 = vld [vmem:[#allocation5 + $0xd4] sm:$0xf]
    %v149 = vld [vmem:[#allocation5 + $0xd8] sm:$0xf]
    %v150 = vld [vmem:[#allocation5 + $0xdc] sm:$0xf]
    %v151 = vld [vmem:[#allocation5 + $0xe0] sm:$0xf]
    %v152 = vld [vmem:[#allocation5 + $0xe4] sm:$0xf]
    %v153 = vld [vmem:[#allocation5 + $0xe8] sm:$0xf]
    %v154 = vld [vmem:[#allocation5 + $0xec] sm:$0xf]
    %v155 = vld [vmem:[#allocation5 + $0xf0] sm:$0xf]
    %v156 = vld [vmem:[#allocation5 + $0xf4] sm:$0xf]
    %v157 = vld [vmem:[#allocation5 + $0xf8] sm:$0xf]
    %v158 = vld [vmem:[#allocation5 + $0xfc] sm:$0xf]
    %v159 = vld [vmem:[#allocation5 + $0x100] sm:$0xf]
    %v160 = vld [vmem:[#allocation5 + $0x104] sm:$0xf]
    %v161 = vld [vmem:[#allocation5 + $0x108] sm:$0xf]
    %v162 = vld [vmem:[#allocation5 + $0x10c] sm:$0xf]
    %v163 = vld [vmem:[#allocation5 + $0x110] sm:$0xf]
    %v164 = vld [vmem:[#allocation5 + $0x114] sm:$0xf]
    %v165 = vld [vmem:[#allocation5 + $0x118] sm:$0xf]
    %v166 = vld [vmem:[#allocation5 + $0x11c] sm:$0xf]
    %v167 = vld [vmem:[#allocation5 + $0x120] sm:$0xf]
    %v168 = vld [vmem:[#allocation5 + $0x124] sm:$0xf]
    %v169 = vld [vmem:[#allocation5 + $0x128] sm:$0xf]
    %v170 = vld [vmem:[#allocation5 + $0x12c] sm:$0xf]
    %v171 = vld [vmem:[#allocation5 + $0x130] sm:$0xf]
    %v172 = vld [vmem:[#allocation5 + $0x134] sm:$0xf]
    %v173 = vld [vmem:[#allocation5 + $0x138] sm:$0xf]
    %v174 = vld [vmem:[#allocation5 + $0x13c] sm:$0xf]
    %v175 = vld [vmem:[#allocation5 + $0x140] sm:$0xf]
    %v176 = vld [vmem:[#allocation5 + $0x144] sm:$0xf]
    %v177 = vld [vmem:[#allocation5 + $0x148] sm:$0xf]
    %v178 = vld [vmem:[#allocation5 + $0x14c] sm:$0xf]
    %v179 = vld [vmem:[#allocation5 + $0x150] sm:$0xf]
    %v180 = vld [vmem:[#allocation5 + $0x154] sm:$0xf]
    %v181 = vld [vmem:[#allocation5 + $0x158] sm:$0xf]
    %v182 = vld [vmem:[#allocation5 + $0x15c] sm:$0xf]
    %v183 = vld [vmem:[#allocation5 + $0x160] sm:$0xf]
    %v184 = vld [vmem:[#allocation5 + $0x164] sm:$0xf]
    %v185 = vld [vmem:[#allocation5 + $0x168] sm:$0xf]
    %v186 = vld [vmem:[#allocation5 + $0x16c] sm:$0xf]
    %v187 = vld [vmem:[#allocation5 + $0x170] sm:$0xf]
    %v188 = vld [vmem:[#allocation5 + $0x174] sm:$0xf]
    %v189 = vld [vmem:[#allocation5 + $0x178] sm:$0xf]
    %v190 = vld [vmem:[#allocation5 + $0x17c] sm:$0xf]
    %v191 = vld [vmem:[#allocation5 + $0x180] sm:$0xf]
    %v192 = vld [vmem:[#allocation5 + $0x184] sm:$0xf]
    %v193 = vld [vmem:[%s2] sm:$0x1]
    %v195 = vlaneseq
    %v196 = vshrl.u32 %v195, 7
    %v197 = vsub.s32 0, %v196
    %v198 = vrot.slane %v193, %v197
    %v298 = vunpack.c.l.b16 %v95
    %v299 = vunpack.c.l.b16 %v96
    %v300 = vunpack.c.l.b16 %v97
    %v301 = vunpack.c.l.b16 %v98
    %v302 = vunpack.c.l.b16 %v99
    %v303 = vunpack.c.l.b16 %v100
    %v304 = vunpack.c.l.b16 %v101
    %v305 = vunpack.c.l.b16 %v102
    %v306 = vunpack.c.l.b16 %v103
    %v307 = vunpack.c.l.b16 %v104
    %v308 = vunpack.c.l.b16 %v105
    %v309 = vunpack.c.l.b16 %v106
    %v310 = vunpack.c.l.b16 %v107
    %v311 = vunpack.c.l.b16 %v108
    %v312 = vunpack.c.l.b16 %v109
    %v313 = vunpack.c.l.b16 %v110
    %v314 = vunpack.c.l.b16 %v111
    %v315 = vunpack.c.l.b16 %v112
    %v316 = vunpack.c.l.b16 %v113
    %v317 = vunpack.c.l.b16 %v114
    %v318 = vunpack.c.l.b16 %v115
    %v319 = vunpack.c.l.b16 %v116
    %v320 = vunpack.c.l.b16 %v117
    %v321 = vunpack.c.l.b16 %v118
    %v322 = vunpack.c.l.b16 %v119
    %v323 = vunpack.c.l.b16 %v120
    %v324 = vunpack.c.l.b16 %v121
    %v325 = vunpack.c.l.b16 %v122
    %v326 = vunpack.c.l.b16 %v123
    %v327 = vunpack.c.l.b16 %v124
    %v328 = vunpack.c.l.b16 %v125
    %v329 = vunpack.c.l.b16 %v126
    %v330 = vunpack.c.l.b16 %v127
    %v331 = vunpack.c.l.b16 %v128
    %v332 = vunpack.c.l.b16 %v129
    %v333 = vunpack.c.l.b16 %v130
    %v334 = vunpack.c.l.b16 %v131
    %v335 = vunpack.c.l.b16 %v132
    %v336 = vunpack.c.l.b16 %v133
    %v337 = vunpack.c.l.b16 %v134
    %v338 = vunpack.c.l.b16 %v135
    %v339 = vunpack.c.l.b16 %v136
    %v340 = vunpack.c.l.b16 %v137
    %v341 = vunpack.c.l.b16 %v138
    %v342 = vunpack.c.l.b16 %v139
    %v343 = vunpack.c.l.b16 %v140
    %v344 = vunpack.c.l.b16 %v141
    %v345 = vunpack.c.l.b16 %v142
    %v346 = vunpack.c.l.b16 %v143
    %v347 = vunpack.c.l.b16 %v144
    %v348 = vunpack.c.l.b16 %v145
    %v349 = vunpack.c.l.b16 %v146
    %v350 = vunpack.c.l.b16 %v147
    %v351 = vunpack.c.l.b16 %v148
    %v352 = vunpack.c.l.b16 %v149
    %v353 = vunpack.c.l.b16 %v150
    %v354 = vunpack.c.l.b16 %v151
    %v355 = vunpack.c.l.b16 %v152
    %v356 = vunpack.c.l.b16 %v153
    %v357 = vunpack.c.l.b16 %v154
    %v358 = vunpack.c.l.b16 %v155
    %v359 = vunpack.c.l.b16 %v156
    %v360 = vunpack.c.l.b16 %v157
    %v361 = vunpack.c.l.b16 %v158
    %v362 = vunpack.c.l.b16 %v159
    %v363 = vunpack.c.l.b16 %v160
    %v364 = vunpack.c.l.b16 %v161
    %v365 = vunpack.c.l.b16 %v162
    %v366 = vunpack.c.l.b16 %v163
    %v367 = vunpack.c.l.b16 %v164
    %v368 = vunpack.c.l.b16 %v165
    %v369 = vunpack.c.l.b16 %v166
    %v370 = vunpack.c.l.b16 %v167
    %v371 = vunpack.c.l.b16 %v168
    %v372 = vunpack.c.l.b16 %v169
    %v373 = vunpack.c.l.b16 %v170
    %v374 = vunpack.c.l.b16 %v171
    %v375 = vunpack.c.l.b16 %v172
    %v376 = vunpack.c.l.b16 %v173
    %v377 = vunpack.c.l.b16 %v174
    %v378 = vunpack.c.l.b16 %v175
    %v379 = vunpack.c.l.b16 %v176
    %v380 = vunpack.c.l.b16 %v177
    %v381 = vunpack.c.l.b16 %v178
    %v382 = vunpack.c.l.b16 %v179
    %v383 = vunpack.c.l.b16 %v180
    %v384 = vunpack.c.l.b16 %v181
    %v385 = vunpack.c.l.b16 %v182
    %v386 = vunpack.c.l.b16 %v183
    %v387 = vunpack.c.l.b16 %v184
    %v388 = vunpack.c.l.b16 %v185
    %v389 = vunpack.c.l.b16 %v186
    %v390 = vunpack.c.l.b16 %v187
    %v391 = vunpack.c.l.b16 %v188
    %v392 = vunpack.c.l.b16 %v189
    %v393 = vunpack.c.l.b16 %v190
    %v394 = vunpack.c.l.b16 %v191
    %v395 = vunpack.c.l.b16 %v192
    %v396 = vpack.c.b16 %v299, %v298
    %v397 = vpack.c.b16 %v301, %v300
    %v398 = vpack.c.b16 %v303, %v302
    %v399 = vpack.c.b16 %v305, %v304
    %v400 = vpack.c.b16 %v307, %v306
    %v401 = vpack.c.b16 %v309, %v308
    %v402 = vpack.c.b16 %v311, %v310
    %v403 = vpack.c.b16 %v313, %v312
    %v404 = vpack.c.b16 %v315, %v314
    %v405 = vpack.c.b16 %v317, %v316
    %v406 = vpack.c.b16 %v319, %v318
    %v407 = vpack.c.b16 %v321, %v320
    %v408 = vpack.c.b16 %v323, %v322
    %v409 = vpack.c.b16 %v325, %v324
    %v410 = vpack.c.b16 %v327, %v326
    %v411 = vpack.c.b16 %v329, %v328
    %v412 = vpack.c.b16 %v331, %v330
    %v413 = vpack.c.b16 %v333, %v332
    %v414 = vpack.c.b16 %v335, %v334
    %v415 = vpack.c.b16 %v337, %v336
    %v416 = vpack.c.b16 %v339, %v338
    %v417 = vpack.c.b16 %v341, %v340
    %v418 = vpack.c.b16 %v343, %v342
    %v419 = vpack.c.b16 %v345, %v344
    %v420 = vpack.c.b16 %v347, %v346
    %v421 = vpack.c.b16 %v349, %v348
    %v422 = vpack.c.b16 %v351, %v350
    %v423 = vpack.c.b16 %v353, %v352
    %v424 = vpack.c.b16 %v355, %v354
    %v425 = vpack.c.b16 %v357, %v356
    %v426 = vpack.c.b16 %v359, %v358
    %v427 = vpack.c.b16 %v361, %v360
    %v428 = vpack.c.b16 %v363, %v362
    %v429 = vpack.c.b16 %v365, %v364
    %v430 = vpack.c.b16 %v367, %v366
    %v431 = vpack.c.b16 %v369, %v368
    %v432 = vpack.c.b16 %v371, %v370
    %v433 = vpack.c.b16 %v373, %v372
    %v434 = vpack.c.b16 %v375, %v374
    %v435 = vpack.c.b16 %v377, %v376
    %v436 = vpack.c.b16 %v379, %v378
    %v437 = vpack.c.b16 %v381, %v380
    %v438 = vpack.c.b16 %v383, %v382
    %v439 = vpack.c.b16 %v385, %v384
    %v440 = vpack.c.b16 %v387, %v386
    %v441 = vpack.c.b16 %v389, %v388
    %v442 = vpack.c.b16 %v391, %v390
    %v443 = vpack.c.b16 %v393, %v392
    %v444 = vpack.c.b16 %v395, %v394
    %vm494 = vcmask 130048
    %v496 = vsel %vm494, %v94, 0
    %498 = vmatprep.subr.bf16.mxu0 0
    %499 = vmatpush1.bf16.msra.mxu0 %v396
    %500 = vmatprep.subr.bf16.mxu0 0
    %501 = vmatpush1.bf16.msra.mxu0 %v397
    %502 = vmatprep.subr.bf16.mxu0 0
    %503 = vmatpush1.bf16.msra.mxu0 %v398
    %504 = vmatprep.subr.bf16.mxu0 0
    %505 = vmatpush1.bf16.msra.mxu0 %v399
    %506 = vmatprep.subr.bf16.mxu0 0
    %507 = vmatpush1.bf16.msra.mxu0 %v400
    %508 = vmatprep.subr.bf16.mxu0 0
    %509 = vmatpush1.bf16.msra.mxu0 %v401
    %510 = vmatprep.subr.bf16.mxu0 0
    %511 = vmatpush1.bf16.msra.mxu0 %v402
    %512 = vmatprep.subr.bf16.mxu0 0
    %513 = vmatpush1.bf16.msra.mxu0 %v403
    %514 = vmatprep.subr.bf16.mxu0 0
    %515 = vmatpush1.bf16.msra.mxu0 %v404
    %516 = vmatprep.subr.bf16.mxu0 0
    %517 = vmatpush1.bf16.msra.mxu0 %v405
    %518 = vmatprep.subr.bf16.mxu0 0
    %519 = vmatpush1.bf16.msra.mxu0 %v406
    %520 = vmatprep.subr.bf16.mxu0 0
    %521 = vmatpush1.bf16.msra.mxu0 %v407
    %522 = vmatprep.subr.bf16.mxu0 0
    %523 = vmatpush1.bf16.msra.mxu0 %v408
    %524 = vmatprep.subr.bf16.mxu0 0
    %525 = vmatpush1.bf16.msra.mxu0 %v409
    %526 = vmatprep.subr.bf16.mxu0 0
    %527 = vmatpush1.bf16.msra.mxu0 %v410
    %528 = vmatprep.subr.bf16.mxu0 0
    %529 = vmatpush1.bf16.msra.mxu0 %v411
    %530 = vmatprep.mubr.bf16.mxu0 %v89
    %531 = vmatmul.mubr.bf16.gmra.mrb[0].mxu0 %v88
    %v532 = vpop.f32.mrb[0].mxu0
    %v533 = vadd.f32 %v198, %v532
    %v534 = vpop.f32.mrb[0].mxu0
    %v535 = vpop.f32.mrb[0].mxu0
    %v536 = vpop.f32.mrb[0].mxu0
    %537 = vdwg.mxu0
    %538 = vmatprep.subr.bf16.mxu0 0
    %539 = vmatpush1.bf16.msra.mxu0 %v412
    %540 = vmatprep.subr.bf16.mxu0 0
    %541 = vmatpush1.bf16.msra.mxu0 %v413
    %542 = vmatprep.subr.bf16.mxu0 0
    %543 = vmatpush1.bf16.msra.mxu0 %v414
    %544 = vmatprep.subr.bf16.mxu0 0
    %545 = vmatpush1.bf16.msra.mxu0 %v415
    %546 = vmatprep.subr.bf16.mxu0 0
    %547 = vmatpush1.bf16.msra.mxu0 %v416
    %548 = vmatprep.subr.bf16.mxu0 0
    %549 = vmatpush1.bf16.msra.mxu0 %v417
    %550 = vmatprep.subr.bf16.mxu0 0
    %551 = vmatpush1.bf16.msra.mxu0 %v418
    %552 = vmatprep.subr.bf16.mxu0 0
    %553 = vmatpush1.bf16.msra.mxu0 %v419
    %554 = vmatprep.subr.bf16.mxu0 0
    %555 = vmatpush1.bf16.msra.mxu0 %v420
    %556 = vmatprep.subr.bf16.mxu0 0
    %557 = vmatpush1.bf16.msra.mxu0 %v421
    %558 = vmatprep.subr.bf16.mxu0 0
    %559 = vmatpush1.bf16.msra.mxu0 %v422
    %560 = vmatprep.subr.bf16.mxu0 0
    %561 = vmatpush1.bf16.msra.mxu0 %v423
    %562 = vmatprep.subr.bf16.mxu0 0
    %563 = vmatpush1.bf16.msra.mxu0 %v424
    %564 = vmatprep.subr.bf16.mxu0 0
    %565 = vmatpush1.bf16.msra.mxu0 %v425
    %566 = vmatprep.subr.bf16.mxu0 0
    %567 = vmatpush1.bf16.msra.mxu0 %v426
    %568 = vmatprep.subr.bf16.mxu0 0
    %569 = vmatpush1.bf16.msra.mxu0 %v427
    %570 = vmatprep.mubr.bf16.mxu0 %v91
    %571 = vmatmul.mubr.bf16.gmra.mrb[0].mxu0 %v90
    %v572 = vpop.f32.mrb[0].mxu0
    %v573 = vadd.f32 %v533, %v572
    %v574 = vpop.f32.mrb[0].mxu0
    %v575 = vpop.f32.mrb[0].mxu0
    %v576 = vpop.f32.mrb[0].mxu0
    %577 = vdwg.mxu0
    %578 = vmatprep.subr.bf16.mxu0 0
    %579 = vmatpush1.bf16.msra.mxu0 %v428
    %580 = vmatprep.subr.bf16.mxu0 0
    %581 = vmatpush1.bf16.msra.mxu0 %v429
    %582 = vmatprep.subr.bf16.mxu0 0
    %583 = vmatpush1.bf16.msra.mxu0 %v430
    %584 = vmatprep.subr.bf16.mxu0 0
    %585 = vmatpush1.bf16.msra.mxu0 %v431
    %586 = vmatprep.subr.bf16.mxu0 0
    %587 = vmatpush1.bf16.msra.mxu0 %v432
    %588 = vmatprep.subr.bf16.mxu0 0
    %589 = vmatpush1.bf16.msra.mxu0 %v433
    %590 = vmatprep.subr.bf16.mxu0 0
    %591 = vmatpush1.bf16.msra.mxu0 %v434
    %592 = vmatprep.subr.bf16.mxu0 0
    %593 = vmatpush1.bf16.msra.mxu0 %v435
    %594 = vmatprep.subr.bf16.mxu0 0
    %595 = vmatpush1.bf16.msra.mxu0 %v436
    %596 = vmatprep.subr.bf16.mxu0 0
    %597 = vmatpush1.bf16.msra.mxu0 %v437
    %598 = vmatprep.subr.bf16.mxu0 0
    %599 = vmatpush1.bf16.msra.mxu0 %v438
    %600 = vmatprep.subr.bf16.mxu0 0
    %601 = vmatpush1.bf16.msra.mxu0 %v439
    %602 = vmatprep.subr.bf16.mxu0 0
    %603 = vmatpush1.bf16.msra.mxu0 %v440
    %604 = vmatprep.subr.bf16.mxu0 0
    %605 = vmatpush1.bf16.msra.mxu0 %v441
    %606 = vmatprep.subr.bf16.mxu0 0
    %607 = vmatpush1.bf16.msra.mxu0 %v442
    %608 = vmatprep.subr.bf16.mxu0 0
    %609 = vmatpush1.bf16.msra.mxu0 %v443
    %610 = vmatprep.mubr.bf16.mxu0 %v93
    %611 = vmatmul.mubr.bf16.gmra.mrb[0].mxu0 %v92
    %v612 = vpop.f32.mrb[0].mxu0
    %v613 = vadd.f32 %v573, %v612
    %v614 = vpop.f32.mrb[0].mxu0
    %v615 = vpop.f32.mrb[0].mxu0
    %v616 = vpop.f32.mrb[0].mxu0
    %617 = vdwg.mxu0
    %618 = vmatprep.subr.bf16.mxu0 0
    %619 = vmatpush1.bf16.msra.mxu0 %v444
    %620 = vmatprep.subr.bf16.mxu0 0
    %621 = vmatpush1.bf16.msra.mxu0 0
    %622 = vmatprep.subr.bf16.mxu0 0
    %623 = vmatpush1.bf16.msra.mxu0 0
    %624 = vmatprep.subr.bf16.mxu0 0
    %625 = vmatpush1.bf16.msra.mxu0 0
    %626 = vmatprep.subr.bf16.mxu0 0
    %627 = vmatpush1.bf16.msra.mxu0 0
    %628 = vmatprep.subr.bf16.mxu0 0
    %629 = vmatpush1.bf16.msra.mxu0 0
    %630 = vmatprep.subr.bf16.mxu0 0
    %631 = vmatpush1.bf16.msra.mxu0 0
    %632 = vmatprep.subr.bf16.mxu0 0
    %633 = vmatpush1.bf16.msra.mxu0 0
    %634 = vmatprep.subr.bf16.mxu0 0
    %635 = vmatpush1.bf16.msra.mxu0 0
    %636 = vmatprep.subr.bf16.mxu0 0
    %637 = vmatpush1.bf16.msra.mxu0 0
    %638 = vmatprep.subr.bf16.mxu0 0
    %639 = vmatpush1.bf16.msra.mxu0 0
    %640 = vmatprep.subr.bf16.mxu0 0
    %641 = vmatpush1.bf16.msra.mxu0 0
    %642 = vmatprep.subr.bf16.mxu0 0
    %643 = vmatpush1.bf16.msra.mxu0 0
    %644 = vmatprep.subr.bf16.mxu0 0
    %645 = vmatpush1.bf16.msra.mxu0 0
    %646 = vmatprep.subr.bf16.mxu0 0
    %647 = vmatpush1.bf16.msra.mxu0 0
    %648 = vmatprep.subr.bf16.mxu0 0
    %649 = vmatpush1.bf16.msra.mxu0 0
    %650 = vmatprep.mubr.bf16.mxu0 0
    %651 = vmatmul.mubr.bf16.gmra.mrb[0].mxu0 %v496
    %v652 = vpop.f32.mrb[0].mxu0
    %v653 = vadd.f32 %v613, %v652
    %v654 = vpop.f32.mrb[0].mxu0
    %v655 = vpop.f32.mrb[0].mxu0
    %v656 = vpop.f32.mrb[0].mxu0
    %657 = vdwg.mxu0
    %v658 = vmax.f32 %v653, 0.0
    %v659 = vpack.c.bf16 %v658, %v658
    %v660 = vld [vmem:[#allocation7] sm:$0xf]
    %v661 = vld [vmem:[#allocation7 + $0x4] sm:$0xf]
    %v662 = vld [vmem:[#allocation7 + $0x8] sm:$0xf]
    %v663 = vld [vmem:[#allocation7 + $0xc] sm:$0xf]
    %v664 = vld [vmem:[#allocation7 + $0x10] sm:$0xf]
    %v665 = vld [vmem:[#allocation7 + $0x14] sm:$0xf]
    %v666 = vld [vmem:[#allocation7 + $0x18] sm:$0xf]
    %v667 = vld [vmem:[#allocation7 + $0x1c] sm:$0xf]
    %v668 = vld [vmem:[#allocation7 + $0x20] sm:$0xf]
    %v669 = vld [vmem:[#allocation7 + $0x24] sm:$0xf]
    %v670 = vld [vmem:[#allocation7 + $0x28] sm:$0xf]
    %v671 = vld [vmem:[#allocation7 + $0x2c] sm:$0xf]
    %v672 = vld [vmem:[#allocation7 + $0x30] sm:$0xf]
    %v673 = vld [vmem:[#allocation7 + $0x34] sm:$0xf]
    %v674 = vld [vmem:[#allocation7 + $0x38] sm:$0xf]
    %v675 = vld [vmem:[#allocation7 + $0x3c] sm:$0xf]
    %v676 = vld [vmem:[%s4] sm:$0x1]
    %v678 = vlaneseq
    %v679 = vshrl.u32 %v678, 7
    %v680 = vsub.s32 0, %v679
    %v681 = vrot.slane %v676, %v680
    %v699 = vunpack.c.l.b16 %v660
    %v700 = vunpack.c.l.b16 %v661
    %v701 = vunpack.c.l.b16 %v662
    %v702 = vunpack.c.l.b16 %v663
    %v703 = vunpack.c.l.b16 %v664
    %v704 = vunpack.c.l.b16 %v665
    %v705 = vunpack.c.l.b16 %v666
    %v706 = vunpack.c.l.b16 %v667
    %v707 = vunpack.c.l.b16 %v668
    %v708 = vunpack.c.l.b16 %v669
    %v709 = vunpack.c.l.b16 %v670
    %v710 = vunpack.c.l.b16 %v671
    %v711 = vunpack.c.l.b16 %v672
    %v712 = vunpack.c.l.b16 %v673
    %v713 = vunpack.c.l.b16 %v674
    %v714 = vunpack.c.l.b16 %v675
    %v715 = vpack.c.b16 %v700, %v699
    %v716 = vpack.c.b16 %v702, %v701
    %v717 = vpack.c.b16 %v704, %v703
    %v718 = vpack.c.b16 %v706, %v705
    %v719 = vpack.c.b16 %v708, %v707
    %v720 = vpack.c.b16 %v710, %v709
    %v721 = vpack.c.b16 %v712, %v711
    %v722 = vpack.c.b16 %v714, %v713
    %731 = vmatprep.subr.bf16.mxu0 0
    %732 = vmatpush1.bf16.msra.mxu0 %v715
    %733 = vmatprep.subr.bf16.mxu0 0
    %734 = vmatpush1.bf16.msra.mxu0 %v716
    %735 = vmatprep.subr.bf16.mxu0 0
    %736 = vmatpush1.bf16.msra.mxu0 %v717
    %737 = vmatprep.subr.bf16.mxu0 0
    %738 = vmatpush1.bf16.msra.mxu0 %v718
    %739 = vmatprep.subr.bf16.mxu0 0
    %740 = vmatpush1.bf16.msra.mxu0 %v719
    %741 = vmatprep.subr.bf16.mxu0 0
    %742 = vmatpush1.bf16.msra.mxu0 %v720
    %743 = vmatprep.subr.bf16.mxu0 0
    %744 = vmatpush1.bf16.msra.mxu0 %v721
    %745 = vmatprep.subr.bf16.mxu0 0
    %746 = vmatpush1.bf16.msra.mxu0 %v722
    %747 = vmatprep.subr.bf16.mxu0 0
    %748 = vmatpush1.bf16.msra.mxu0 0
    %749 = vmatprep.subr.bf16.mxu0 0
    %750 = vmatpush1.bf16.msra.mxu0 0
    %751 = vmatprep.subr.bf16.mxu0 0
    %752 = vmatpush1.bf16.msra.mxu0 0
    %753 = vmatprep.subr.bf16.mxu0 0
    %754 = vmatpush1.bf16.msra.mxu0 0
    %755 = vmatprep.subr.bf16.mxu0 0
    %756 = vmatpush1.bf16.msra.mxu0 0
    %757 = vmatprep.subr.bf16.mxu0 0
    %758 = vmatpush1.bf16.msra.mxu0 0
    %759 = vmatprep.subr.bf16.mxu0 0
    %760 = vmatpush1.bf16.msra.mxu0 0
    %761 = vmatprep.subr.bf16.mxu0 0
    %762 = vmatpush1.bf16.msra.mxu0 0
    %763 = vmatprep.mubr.bf16.mxu0 0
    %764 = vmatmul.mubr.bf16.gmra.mrb[0].mxu0 %v659
    %v765 = vpop.f32.mrb[0].mxu0
    %v766 = vadd.f32 %v681, %v765
    %v767 = vpop.f32.mrb[0].mxu0
    %v768 = vpop.f32.mrb[0].mxu0
    %v769 = vpop.f32.mrb[0].mxu0
    %770 = vdwg.mxu0
    %v771 = vmax.f32 %v766, 0.0
    %v772 = vpack.c.bf16 %v771, %v771
    %v773 = vld [vmem:[#allocation8] sm:$0xf]
    %v774 = vld [vmem:[#allocation8 + $0x4] sm:$0xf]
    %v775 = vld [vmem:[#allocation8 + $0x8] sm:$0xf]
    %v776 = vld [vmem:[#allocation8 + $0xc] sm:$0xf]
    %v777 = vld [vmem:[#allocation8 + $0x10] sm:$0xf]
    %v778 = vld [vmem:[#allocation8 + $0x14] sm:$0xf]
    %v779 = vld [vmem:[#allocation8 + $0x18] sm:$0xf]
    %v780 = vld [vmem:[#allocation8 + $0x1c] sm:$0xf]
    %v781 = vld [vmem:[#allocation8 + $0x20] sm:$0xf]
    %v782 = vld [vmem:[#allocation8 + $0x24] sm:$0xf]
    %v783 = vld [vmem:[#allocation8 + $0x28] sm:$0xf]
    %v784 = vld [vmem:[#allocation8 + $0x2c] sm:$0xf]
    %v785 = vld [vmem:[#allocation8 + $0x30] sm:$0xf]
    %v786 = vld [vmem:[#allocation8 + $0x34] sm:$0xf]
    %v787 = vld [vmem:[#allocation8 + $0x38] sm:$0xf]
    %v788 = vld [vmem:[#allocation8 + $0x3c] sm:$0xf]
    %v789 = vld [vmem:[%s6] sm:$0x1]
    %v791 = vlaneseq
    %v792 = vshrl.u32 %v791, 7
    %v793 = vsub.s32 0, %v792
    %v794 = vrot.slane %v789, %v793
    %v812 = vunpack.c.l.b16 %v773
    %v813 = vunpack.c.l.b16 %v774
    %v814 = vunpack.c.l.b16 %v775
    %v815 = vunpack.c.l.b16 %v776
    %v816 = vunpack.c.l.b16 %v777
    %v817 = vunpack.c.l.b16 %v778
    %v818 = vunpack.c.l.b16 %v779
    %v819 = vunpack.c.l.b16 %v780
    %v820 = vunpack.c.l.b16 %v781
    %v821 = vunpack.c.l.b16 %v782
    %v822 = vunpack.c.l.b16 %v783
    %v823 = vunpack.c.l.b16 %v784
    %v824 = vunpack.c.l.b16 %v785
    %v825 = vunpack.c.l.b16 %v786
    %v826 = vunpack.c.l.b16 %v787
    %v827 = vunpack.c.l.b16 %v788
    %v828 = vpack.c.b16 %v813, %v812
    %v829 = vpack.c.b16 %v815, %v814
    %v830 = vpack.c.b16 %v817, %v816
    %v831 = vpack.c.b16 %v819, %v818
    %v832 = vpack.c.b16 %v821, %v820
    %v833 = vpack.c.b16 %v823, %v822
    %v834 = vpack.c.b16 %v825, %v824
    %v835 = vpack.c.b16 %v827, %v826
    %844 = vmatprep.subr.bf16.mxu0 0
    %845 = vmatpush1.bf16.msra.mxu0 %v828
    %846 = vmatprep.subr.bf16.mxu0 0
    %847 = vmatpush1.bf16.msra.mxu0 %v829
    %848 = vmatprep.subr.bf16.mxu0 0
    %849 = vmatpush1.bf16.msra.mxu0 %v830
    %850 = vmatprep.subr.bf16.mxu0 0
    %851 = vmatpush1.bf16.msra.mxu0 %v831
    %852 = vmatprep.subr.bf16.mxu0 0
    %853 = vmatpush1.bf16.msra.mxu0 %v832
    %854 = vmatprep.subr.bf16.mxu0 0
    %855 = vmatpush1.bf16.msra.mxu0 %v833
    %856 = vmatprep.subr.bf16.mxu0 0
    %857 = vmatpush1.bf16.msra.mxu0 %v834
    %858 = vmatprep.subr.bf16.mxu0 0
    %859 = vmatpush1.bf16.msra.mxu0 %v835
    %860 = vmatprep.subr.bf16.mxu0 0
    %861 = vmatpush1.bf16.msra.mxu0 0
    %862 = vmatprep.subr.bf16.mxu0 0
    %863 = vmatpush1.bf16.msra.mxu0 0
    %864 = vmatprep.subr.bf16.mxu0 0
    %865 = vmatpush1.bf16.msra.mxu0 0
    %866 = vmatprep.subr.bf16.mxu0 0
    %867 = vmatpush1.bf16.msra.mxu0 0
    %868 = vmatprep.subr.bf16.mxu0 0
    %869 = vmatpush1.bf16.msra.mxu0 0
    %870 = vmatprep.subr.bf16.mxu0 0
    %871 = vmatpush1.bf16.msra.mxu0 0
    %872 = vmatprep.subr.bf16.mxu0 0
    %873 = vmatpush1.bf16.msra.mxu0 0
    %874 = vmatprep.subr.bf16.mxu0 0
    %875 = vmatpush1.bf16.msra.mxu0 0
    %876 = vmatprep.mubr.bf16.mxu0 0
    %877 = vmatmul.mubr.bf16.gmra.mrb[0].mxu0 %v772
    %v878 = vpop.f32.mrb[0].mxu0
    %v879 = vadd.f32 %v794, %v878
    %v880 = vpop.f32.mrb[0].mxu0
    %v881 = vpop.f32.mrb[0].mxu0
    %v882 = vpop.f32.mrb[0].mxu0
    %883 = vdwg.mxu0
    %v884 = vpack.c.bf16 %v879, %v879
    %885 = vst [vmem:[#allocation10] sm:$0xf] %v884
    // Predicated region
    $region46: #{tpu_custom_call.1} parent=1 // pred_check
      _
    $region47: #{tpu_custom_call.1} parent=1 // pred_check_branch
      %887 = sbr.rel (0) target = $region49
    $region48: #{tpu_custom_call.1} parent=1 // pred_region
      %s889 = ssub.s32 64, 64
      %890 = vsyncadd [#allocation4], %s889
      %s892 = sshll.u32 [#allocation10], 4
      %s893 = int_to_ptr.vmem [resolvable:$true] %s892
      %895 = dma.vmem_to_hbm [thread:$0]  %s893, 64, %s7, [#allocation4]
    $region49: #{tpu_custom_call.1} parent=1 // pred_fallthru
      _
    // Predicated region
    $region50: #{tpu_custom_call.1} parent=1 // pred_check
      _
    $region51: #{tpu_custom_call.1} parent=1 // pred_check_branch
      %897 = sbr.rel (0) target = $region53
    $region52: #{tpu_custom_call.1} parent=1 // pred_region
      %898 = dma.done [#allocation4], 64
    $region53: #{tpu_custom_call.1} parent=1 // pred_fallthru
      _
    %899 = vsyncpa [#allocation3], 1
    %900 = vsyncpa [#allocation6], 1
    %901 = vsyncpa [#allocation9], 1
    %902 = vsyncpa [#allocation4], 1

</llo_original>
